<compile_context>
chip_gen: v7x
topology: tpu7x:2x2x1
jax: 0.10.0
libtpu: 0.0.40
codegen_flags: <defaults>
</compile_context>

<pallas_src>
import numpy as np
import jax
import jax.numpy as jnp
from jax.experimental import pallas as pl
from jax.experimental.pallas import tpu as pltpu

# ---------------- small deterministic config ----------------
FIELD_DIMS = (5, 7, 6, 4)            # F = 4 fields, 22 total features
NUM_FIELDS = len(FIELD_DIMS)
NUM_FEATURES = int(sum(FIELD_DIMS))
DIM = 32                             # embedding dim
M = 4                                # PQ sub-vectors
K = 4                                # codewords per (field, sub-vector)
PLEN = DIM // M
PACK = 4                             # codeword ids byte-packed per int32
BATCH = 8

# Batch-tile cap: lane-dense multiples of 128, large enough to amortize the
# ~0.35 us per-grid-step overhead, tiny versus VMEM on every generation.
BT_MAX = 2048


def qfm_kernel(sel_ref, cb_ref, lin_ref, out_ref):
    """Fused PQ one-hot build + single MXU contraction + FM finalize.

    sel_ref : (G, BT) int32 — PACK codeword ids byte-packed per int32 word;
              batch tile on the lane axis.
    cb_ref  : (D+1, K*PACK*G) f32 — chunk-masked codebook, columns ordered
              (k, p, g) to match the in-kernel one-hot; the extra bottom row
              holds per-(slot, codeword) squared norms.  Constant index_map
              => resident in VMEM across the whole grid.
    lin_ref : (1, BT) f32 — FeaturesLinear sum + bias (pre-reduced).
    out_ref : (1, BT) f32 — lane-dense output row.
    """
    d1 = cb_ref.shape[0]
    d = d1 - 1                                            # embedding dim D

    packed = sel_ref[...]                                 # (G, BT) int32, >= 0
    # Unpack the PACK byte-lanes once (VPU shifts/masks) ...
    ids = [(packed >> (8 * p)) & 0xFF for p in range(PACK)]
    # ... then K unrolled compares build the one-hot directly in the codebook's
    # (k, p, g) column order.  No iota / div / mod / expand-matmul per step.
    s = jnp.concatenate(
        [(ids[p] == k).astype(jnp.float32)
         for k in range(K) for p in range(PACK)],
        axis=0)                                           # (K*PACK*G, BT)

    # Single fused contraction: rows 0..D-1 -> sum_f e ; row D -> sum_f ||e||^2.
    res = jnp.dot(cb_ref[...], s, preferred_element_type=jnp.float32)  # (D+1, BT)
    sum_e = res[:d, :]                                    # (D, BT)
    sum_sq = res[d:, :]                                   # (1, BT)

    # FM(reduce_sum=True): 0.5 * [ sum_d (sum_f e)^2 - sum_d sum_f e^2 ]
    fm = 0.5 * (jnp.sum(sum_e * sum_e, axis=0, keepdims=True) - sum_sq)
    out_ref[...] = lin_ref[...] + fm


def _round_up(a, m):
    return -(-a // m) * m


def prepare_qfm_params(raw):
    """One-time static rearrangement of the PQ codebook (init-time, not per call).

    Builds the fused (D+1, K*PACK*G) operand:
      column (k, p, g) = chunk-masked codeword k of slot s = g*PACK + p,
      rows 0..D-1 = masked codeword values, row D = its squared norm.
    """
    codebooks = raw["codebooks"].astype(jnp.float32)        # (F*K, D)
    F = NUM_FIELDS
    D = codebooks.shape[1]
    plen = D // M
    S = F * M
    assert S % PACK == 0, "F*M must be divisible by the id packing factor"
    assert K <= 256, "byte packing requires K <= 256"
    G = S // PACK

    # chunk mask: slot (f, m) only contributes on dims [m*plen, (m+1)*plen)
    chunk_mask = (jnp.arange(D, dtype=jnp.int32)[None, :] // plen
                  == jnp.arange(M, dtype=jnp.int32)[:, None]).astype(jnp.float32)
    cb_fkd = codebooks.reshape(F, K, D)
    cbsel = cb_fkd[:, None, :, :] * chunk_mask[None, :, None, :]   # (F, M, K, D)
    cbsel = cbsel.reshape(S, K, D)                                 # slot s = f*M + m
    sq = jnp.sum(cbsel * cbsel, axis=-1, keepdims=True)            # (S, K, 1)
    fused = jnp.concatenate([cbsel, sq], axis=-1)                  # (S, K, D+1)

    # reorder columns to (k, p, g) with slot s = g*PACK + p (matches the kernel)
    fused = fused.reshape(G, PACK, K, D + 1)
    fused = jnp.transpose(fused, (2, 1, 0, 3))                     # (K, PACK, G, D+1)
    cb_fused_t = fused.reshape(K * PACK * G, D + 1).T              # (D+1, K*PACK*G)

    return {
        "offsets": raw["offsets"].astype(jnp.int32),
        "cb_index": raw["cb_index"].astype(jnp.int32),
        "fc_weight": raw["fc_weight"].astype(jnp.float32),
        "bias": raw["bias"].astype(jnp.float32),
        "cb_fused_t": cb_fused_t,
    }


@jax.jit
def qfm_forward(x, prepped):
    """x: int32 (B, F). Returns float32 (B,), matching torch forward's squeeze(1)."""
    offsets = prepped["offsets"]          # (F,)               int32
    cb_index = prepped["cb_index"]        # (num_features, M)  int32 in [0, K)
    fc_weight = prepped["fc_weight"]      # (num_features, 1)  f32
    bias = prepped["bias"]                # (1, 1)             f32
    cb_fused_t = prepped["cb_fused_t"]    # (D+1, K*PACK*G)    f32

    B, F = x.shape
    D1, KPG = cb_fused_t.shape
    G = (F * M) // PACK

    x_off = x + offsets[None, :]                                       # (B, F) int32

    # ---- integer-only index glue (no f32 embedding intermediate) ----
    # codeword id per (sample, field, sub-vector); byte-pack PACK ids per int32
    # (4x less HBM traffic on the dominant per-sample stream); batch on lanes.
    sel = cb_index[x_off].reshape(B, G, PACK)                          # (B, G, 4)
    packed = (sel[..., 0] | (sel[..., 1] << 8)
              | (sel[..., 2] << 16) | (sel[..., 3] << 24))             # (B, G) int32
    sel_t = packed.T                                                   # (G, B)

    # FeaturesLinear: tiny per-feature gather, pre-reduced with bias -> (1, B)
    lin_row = (jnp.sum(fc_weight[x_off, 0], axis=-1) + bias[0, 0]).reshape(1, B)
    lin_row = lin_row.astype(jnp.float32)

    # ---- batch tiling: lane-dense tiles, >=2 tiles when possible (v7x 2-TC) ----
    b_pad = _round_up(B, 128)
    if b_pad <= 128:
        bt = b_pad                                   # single lane-dense tile
    else:
        bt = min(BT_MAX, max(128, (b_pad // 2) // 128 * 128))
        b_pad = _round_up(b_pad, bt)
    if b_pad != B:
        sel_t = jnp.pad(sel_t, ((0, 0), (0, b_pad - B)))
        lin_row = jnp.pad(lin_row, ((0, 0), (0, b_pad - B)))

    out = pl.pallas_call(
        qfm_kernel,
        out_shape=jax.ShapeDtypeStruct((1, b_pad), jnp.float32),
        grid_spec=pltpu.PrefetchScalarGridSpec(
            num_scalar_prefetch=0,
            grid=(b_pad // bt,),
            in_specs=[
                pl.BlockSpec((G, bt), lambda i: (0, i)),     # packed ids (batch tile)
                pl.BlockSpec((D1, KPG), lambda i: (0, 0)),   # fused codebook (resident)
                pl.BlockSpec((1, bt), lambda i: (0, i)),     # linear + bias row
            ],
            out_specs=pl.BlockSpec((1, bt), lambda i: (0, i)),
        ),
        compiler_params=pltpu.CompilerParams(
            dimension_semantics=("parallel",)),
    )(sel_t, cb_fused_t, lin_row)

    return out[0, :B]                                                  # squeeze(1) -> (B,)


def qfm_reference(x, params):
    """Pure-JAX reference of the same forward (unfused), for correctness check."""
    offsets = params["offsets"]
    x_off = x + offsets[None, :]
    idx = params["cb_index"][x_off]
    idx = idx + (jnp.arange(x.shape[1], dtype=jnp.int32) * K)[None, :, None]
    cw = params["codebooks"][idx].reshape(x.shape[0], x.shape[1], M, M, PLEN)
    diag = jnp.arange(M)
    x_emb = cw[:, :, diag, diag, :].reshape(x.shape[0], x.shape[1], DIM)

    lin = jnp.sum(params["fc_weight"][x_off, 0], axis=-1, keepdims=True) + params["bias"][0]
    sq_of_sum = jnp.sum(x_emb, axis=1) ** 2
    sum_of_sq = jnp.sum(x_emb ** 2, axis=1)
    fm = 0.5 * jnp.sum(sq_of_sum - sum_of_sq, axis=-1, keepdims=True)
    return (lin + fm)[:, 0]


if __name__ == "__main__":
    key = jax.random.PRNGKey(0)
    k_cb, k_idx, k_fc, k_b, k_x = jax.random.split(key, 5)

    raw_params = {
        "offsets": jnp.asarray(
            np.array((0, *np.cumsum(FIELD_DIMS)[:-1]), dtype=np.int32)),
        "codebooks": 0.1 * jax.random.normal(k_cb, (NUM_FIELDS * K, DIM), jnp.float32),
        "cb_index": jax.random.randint(k_idx, (NUM_FEATURES, M), 0, K, jnp.int32),
        "fc_weight": 0.1 * jax.random.normal(k_fc, (NUM_FEATURES, 1), jnp.float32),
        "bias": 0.05 * jax.random.normal(k_b, (1, 1), jnp.float32),
    }
    params = prepare_qfm_params(raw_params)       # one-time codebook rearrangement

    # x: (batch, num_fields), entry f in [0, field_dims[f])
    x = jax.random.randint(
        k_x, (BATCH, NUM_FIELDS), 0, jnp.asarray(FIELD_DIMS, dtype=jnp.int32),
        dtype=jnp.int32)

    out = qfm_forward(x, params)
    out = jax.block_until_ready(out)

    ref = qfm_reference(x, raw_params)
    np.testing.assert_allclose(np.asarray(out), np.asarray(ref), rtol=1e-5, atol=1e-5)
    assert out.shape == (BATCH,)

    print("KERNEL_OK")
</pallas_src>

<mosaic_0001>
module attributes {stable_mosaic.version = 11 : i64} {
  func.func @qfm_kernel(%arg0: i32, %arg1: memref<4x128xi32, #tpu.memory_space<vmem>>, %arg2: memref<33x64xf32, #tpu.memory_space<vmem>>, %arg3: memref<1x128xf32, #tpu.memory_space<vmem>>, %arg4: memref<1x128xf32, #tpu.memory_space<vmem>>) attributes {dimension_semantics = [#tpu.dimension_semantics<parallel>], iteration_bounds = array<i64: 1>, scalar_prefetch = 0 : i64, scratch_operands = 0 : i64, tpu.core_type = #tpu.core_type<tc>, window_params = [{transform_indices = @transform_0, window_bounds = array<i64: 4, 128>}, {pipeline_mode = #tpu.pipeline_mode<synchronous>, transform_indices = @transform_1, window_bounds = array<i64: 33, 64>}, {transform_indices = @transform_2, window_bounds = array<i64: 1, 128>}, {transform_indices = @transform_3, window_bounds = array<i64: 1, 128>}]} {
    %c0 = arith.constant 0 : index
    %c0_0 = arith.constant 0 : index
    %0 = vector.load %arg1[%c0, %c0_0] : memref<4x128xi32, #tpu.memory_space<vmem>>, vector<4x128xi32>
    %c0_i32 = arith.constant 0 : i32
    %1 = vector.broadcast %c0_i32 : i32 to vector<4x128xi32>
    %2 = arith.shrsi %0, %1 : vector<4x128xi32>
    %c255_i32 = arith.constant 255 : i32
    %3 = vector.broadcast %c255_i32 : i32 to vector<4x128xi32>
    %4 = arith.andi %2, %3 : vector<4x128xi32>
    %c8_i32 = arith.constant 8 : i32
    %5 = vector.broadcast %c8_i32 : i32 to vector<4x128xi32>
    %6 = arith.shrsi %0, %5 : vector<4x128xi32>
    %c255_i32_1 = arith.constant 255 : i32
    %7 = vector.broadcast %c255_i32_1 : i32 to vector<4x128xi32>
    %8 = arith.andi %6, %7 : vector<4x128xi32>
    %c16_i32 = arith.constant 16 : i32
    %9 = vector.broadcast %c16_i32 : i32 to vector<4x128xi32>
    %10 = arith.shrsi %0, %9 : vector<4x128xi32>
    %c255_i32_2 = arith.constant 255 : i32
    %11 = vector.broadcast %c255_i32_2 : i32 to vector<4x128xi32>
    %12 = arith.andi %10, %11 : vector<4x128xi32>
    %c24_i32 = arith.constant 24 : i32
    %13 = vector.broadcast %c24_i32 : i32 to vector<4x128xi32>
    %14 = arith.shrsi %0, %13 : vector<4x128xi32>
    %c255_i32_3 = arith.constant 255 : i32
    %15 = vector.broadcast %c255_i32_3 : i32 to vector<4x128xi32>
    %16 = arith.andi %14, %15 : vector<4x128xi32>
    %c0_i32_4 = arith.constant 0 : i32
    %17 = vector.broadcast %c0_i32_4 : i32 to vector<4x128xi32>
    %18 = arith.cmpi eq, %4, %17 : vector<4x128xi32>
    %19 = arith.extui %18 : vector<4x128xi1> to vector<4x128xi32>
    %20 = arith.sitofp %19 : vector<4x128xi32> to vector<4x128xf32>
    %c0_i32_5 = arith.constant 0 : i32
    %21 = vector.broadcast %c0_i32_5 : i32 to vector<4x128xi32>
    %22 = arith.cmpi eq, %8, %21 : vector<4x128xi32>
    %23 = arith.extui %22 : vector<4x128xi1> to vector<4x128xi32>
    %24 = arith.sitofp %23 : vector<4x128xi32> to vector<4x128xf32>
    %c0_i32_6 = arith.constant 0 : i32
    %25 = vector.broadcast %c0_i32_6 : i32 to vector<4x128xi32>
    %26 = arith.cmpi eq, %12, %25 : vector<4x128xi32>
    %27 = arith.extui %26 : vector<4x128xi1> to vector<4x128xi32>
    %28 = arith.sitofp %27 : vector<4x128xi32> to vector<4x128xf32>
    %c0_i32_7 = arith.constant 0 : i32
    %29 = vector.broadcast %c0_i32_7 : i32 to vector<4x128xi32>
    %30 = arith.cmpi eq, %16, %29 : vector<4x128xi32>
    %31 = arith.extui %30 : vector<4x128xi1> to vector<4x128xi32>
    %32 = arith.sitofp %31 : vector<4x128xi32> to vector<4x128xf32>
    %c1_i32 = arith.constant 1 : i32
    %33 = vector.broadcast %c1_i32 : i32 to vector<4x128xi32>
    %34 = arith.cmpi eq, %4, %33 : vector<4x128xi32>
    %35 = arith.extui %34 : vector<4x128xi1> to vector<4x128xi32>
    %36 = arith.sitofp %35 : vector<4x128xi32> to vector<4x128xf32>
    %c1_i32_8 = arith.constant 1 : i32
    %37 = vector.broadcast %c1_i32_8 : i32 to vector<4x128xi32>
    %38 = arith.cmpi eq, %8, %37 : vector<4x128xi32>
    %39 = arith.extui %38 : vector<4x128xi1> to vector<4x128xi32>
    %40 = arith.sitofp %39 : vector<4x128xi32> to vector<4x128xf32>
    %c1_i32_9 = arith.constant 1 : i32
    %41 = vector.broadcast %c1_i32_9 : i32 to vector<4x128xi32>
    %42 = arith.cmpi eq, %12, %41 : vector<4x128xi32>
    %43 = arith.extui %42 : vector<4x128xi1> to vector<4x128xi32>
    %44 = arith.sitofp %43 : vector<4x128xi32> to vector<4x128xf32>
    %c1_i32_10 = arith.constant 1 : i32
    %45 = vector.broadcast %c1_i32_10 : i32 to vector<4x128xi32>
    %46 = arith.cmpi eq, %16, %45 : vector<4x128xi32>
    %47 = arith.extui %46 : vector<4x128xi1> to vector<4x128xi32>
    %48 = arith.sitofp %47 : vector<4x128xi32> to vector<4x128xf32>
    %c2_i32 = arith.constant 2 : i32
    %49 = vector.broadcast %c2_i32 : i32 to vector<4x128xi32>
    %50 = arith.cmpi eq, %4, %49 : vector<4x128xi32>
    %51 = arith.extui %50 : vector<4x128xi1> to vector<4x128xi32>
    %52 = arith.sitofp %51 : vector<4x128xi32> to vector<4x128xf32>
    %c2_i32_11 = arith.constant 2 : i32
    %53 = vector.broadcast %c2_i32_11 : i32 to vector<4x128xi32>
    %54 = arith.cmpi eq, %8, %53 : vector<4x128xi32>
    %55 = arith.extui %54 : vector<4x128xi1> to vector<4x128xi32>
    %56 = arith.sitofp %55 : vector<4x128xi32> to vector<4x128xf32>
    %c2_i32_12 = arith.constant 2 : i32
    %57 = vector.broadcast %c2_i32_12 : i32 to vector<4x128xi32>
    %58 = arith.cmpi eq, %12, %57 : vector<4x128xi32>
    %59 = arith.extui %58 : vector<4x128xi1> to vector<4x128xi32>
    %60 = arith.sitofp %59 : vector<4x128xi32> to vector<4x128xf32>
    %c2_i32_13 = arith.constant 2 : i32
    %61 = vector.broadcast %c2_i32_13 : i32 to vector<4x128xi32>
    %62 = arith.cmpi eq, %16, %61 : vector<4x128xi32>
    %63 = arith.extui %62 : vector<4x128xi1> to vector<4x128xi32>
    %64 = arith.sitofp %63 : vector<4x128xi32> to vector<4x128xf32>
    %c3_i32 = arith.constant 3 : i32
    %65 = vector.broadcast %c3_i32 : i32 to vector<4x128xi32>
    %66 = arith.cmpi eq, %4, %65 : vector<4x128xi32>
    %67 = arith.extui %66 : vector<4x128xi1> to vector<4x128xi32>
    %68 = arith.sitofp %67 : vector<4x128xi32> to vector<4x128xf32>
    %c3_i32_14 = arith.constant 3 : i32
    %69 = vector.broadcast %c3_i32_14 : i32 to vector<4x128xi32>
    %70 = arith.cmpi eq, %8, %69 : vector<4x128xi32>
    %71 = arith.extui %70 : vector<4x128xi1> to vector<4x128xi32>
    %72 = arith.sitofp %71 : vector<4x128xi32> to vector<4x128xf32>
    %c3_i32_15 = arith.constant 3 : i32
    %73 = vector.broadcast %c3_i32_15 : i32 to vector<4x128xi32>
    %74 = arith.cmpi eq, %12, %73 : vector<4x128xi32>
    %75 = arith.extui %74 : vector<4x128xi1> to vector<4x128xi32>
    %76 = arith.sitofp %75 : vector<4x128xi32> to vector<4x128xf32>
    %c3_i32_16 = arith.constant 3 : i32
    %77 = vector.broadcast %c3_i32_16 : i32 to vector<4x128xi32>
    %78 = arith.cmpi eq, %16, %77 : vector<4x128xi32>
    %79 = arith.extui %78 : vector<4x128xi1> to vector<4x128xi32>
    %80 = arith.sitofp %79 : vector<4x128xi32> to vector<4x128xf32>
    %81 = tpu.concatenate %20, %24, %28, %32, %36, %40, %44, %48, %52, %56, %60, %64, %68, %72, %76, %80 in 0 : vector<4x128xf32>, vector<4x128xf32>, vector<4x128xf32>, vector<4x128xf32>, vector<4x128xf32>, vector<4x128xf32>, vector<4x128xf32>, vector<4x128xf32>, vector<4x128xf32>, vector<4x128xf32>, vector<4x128xf32>, vector<4x128xf32>, vector<4x128xf32>, vector<4x128xf32>, vector<4x128xf32>, vector<4x128xf32> -> vector<64x128xf32>
    %c0_17 = arith.constant 0 : index
    %c0_18 = arith.constant 0 : index
    %82 = vector.load %arg2[%c0_17, %c0_18] : memref<33x64xf32, #tpu.memory_space<vmem>>, vector<33x64xf32>
    %cst = arith.constant dense<0.000000e+00> : vector<33x128xf32>
    %83 = tpu.matmul %82, %81, %cst {dimension_numbers = #tpu.dot_dimension_numbers<[1], [0], [0], [1], [0, 0, 1, 1], [], []>} : vector<33x64xf32>, vector<64x128xf32>, vector<33x128xf32> -> vector<33x128xf32>
    %84 = vector.extract_strided_slice %83 {offsets = [0, 0], sizes = [32, 128], strides = [1, 1]} : vector<33x128xf32> to vector<32x128xf32>
    %85 = vector.extract_strided_slice %83 {offsets = [32, 0], sizes = [1, 128], strides = [1, 1]} : vector<33x128xf32> to vector<1x128xf32>
    %86 = arith.mulf %84, %84 : vector<32x128xf32>
    %cst_19 = arith.constant dense<0.000000e+00> : vector<128xf32>
    %87 = vector.multi_reduction <add>, %86, %cst_19 [0] : vector<32x128xf32> to vector<128xf32>
    %88 = vector.shape_cast %87 : vector<128xf32> to vector<1x128xf32>
    %89 = arith.subf %88, %85 : vector<1x128xf32>
    %cst_20 = arith.constant 5.000000e-01 : f32
    %90 = vector.broadcast %cst_20 : f32 to vector<1x128xf32>
    %91 = arith.mulf %90, %89 : vector<1x128xf32>
    %c0_21 = arith.constant 0 : index
    %c0_22 = arith.constant 0 : index
    %92 = vector.load %arg3[%c0_21, %c0_22] : memref<1x128xf32, #tpu.memory_space<vmem>>, vector<1x128xf32>
    %93 = arith.addf %92, %91 : vector<1x128xf32>
    %c0_23 = arith.constant 0 : index
    %c0_24 = arith.constant 0 : index
    %94 = vector.load %arg4[%c0_23, %c0_24] : memref<1x128xf32, #tpu.memory_space<vmem>>, vector<1x128xf32>
    tpu.vector_store %arg4[%c0_23, %c0_24], %93 {strides = array<i32>} : memref<1x128xf32, #tpu.memory_space<vmem>>, vector<1x128xf32>,
    return
  }
  func.func @transform_0(%arg0: i32) -> (i32, i32) {
    %c0_i32 = arith.constant 0 : i32
    %c0_i32_0 = arith.constant 0 : i32
    return %c0_i32, %arg0 : i32, i32
  }
  func.func @transform_1(%arg0: i32) -> (i32, i32) {
    %c0_i32 = arith.constant 0 : i32
    %c0_i32_0 = arith.constant 0 : i32
    %c0_i32_1 = arith.constant 0 : i32
    return %c0_i32, %c0_i32_0 : i32, i32
  }
  func.func @transform_2(%arg0: i32) -> (i32, i32) {
    %c0_i32 = arith.constant 0 : i32
    %c0_i32_0 = arith.constant 0 : i32
    return %c0_i32, %arg0 : i32, i32
  }
  func.func @transform_3(%arg0: i32) -> (i32, i32) {
    %c0_i32 = arith.constant 0 : i32
    %c0_i32_0 = arith.constant 0 : i32
    return %c0_i32, %arg0 : i32, i32
  }
}

</mosaic_0001>

<llo_original>
// kernel: qfm_forward.1
$region0: #{qfm_forward.1}
  #allocation0 [shape = 'u32[]', space=smem, size = 0x4, offset = 0x4, fixed_abs, tag = 'smem constant byte address 0x4 - core index']
  #allocation1 [shape = 'u32[144,128]{1,0:T(1,128)}', space=vmem, size = 0x12000, scoped, tag = 'internal scratch']
  %s0 = inlined_call_operand.vmem [shape: s32[4,128], index: 0, kind: input, shape index: {}]
  %s1 = inlined_call_operand.vmem [shape: f32[33,64], index: 1, kind: input, shape index: {}]
  %s2 = inlined_call_operand.vmem [shape: f32[1,128], index: 2, kind: input, shape index: {}]
  %s3 = inlined_call_operand.vmem [shape: f32[1,128], index: 3, kind: output, shape index: {}]
  %s4 = sld [smem:[#allocation0]]
  $region22: #{qfm_forward.1} parent=0
    _
  %s6 = ssub.s32 1, %s4
  %s7 = scalar_select 0, %s6, %s4
  // Predicated region
  $region2: #{qfm_forward.1} parent=0 // pred_check
    _
  $region3: #{qfm_forward.1} parent=0 // pred_check_branch
    %9 = sbr.rel (0) target = $region5
  $region4: #{qfm_forward.1} parent=0 // pred_region
    _
  $region5: #{qfm_forward.1} parent=0 // pred_fallthru
    _
  // Predicated region
  $region6: #{qfm_forward.1} parent=0 // pred_check
    _
  $region7: #{qfm_forward.1} parent=0 // pred_check_branch
    %11 = sbr.rel (0) target = $region9
  $region8: #{qfm_forward.1} parent=0 // pred_region
    _
  $region9: #{qfm_forward.1} parent=0 // pred_fallthru
    _
  // Predicated region
  $region10: #{qfm_forward.1} parent=0 // pred_check
    _
  $region11: #{qfm_forward.1} parent=0 // pred_check_branch
    %13 = sbr.rel (0) target = $region13
  $region12: #{qfm_forward.1} parent=0 // pred_region
    _
  $region13: #{qfm_forward.1} parent=0 // pred_fallthru
    _
  %v14 = vld [vmem:[%s0] sm:$0xf]
  %v15 = vand.u32 %v14, 255
  %v16 = vshra.s32 %v14, 8
  %v17 = vand.u32 %v16, 255
  %v18 = vshra.s32 %v14, 16
  %v19 = vand.u32 %v18, 255
  %v20 = vshra.s32 %v14, 24
  %v21 = vand.u32 %v20, 255
  %vm22 = vcmp.eq.s32.totalorder %v15, 0
  %v23 = vsel %vm22, 1, 0
  %v24 = vcvt.s32.f32 %v23
  %vm25 = vcmp.eq.s32.totalorder %v17, 0
  %v26 = vsel %vm25, 1, 0
  %v27 = vcvt.s32.f32 %v26
  %vm28 = vcmp.eq.s32.totalorder %v19, 0
  %v29 = vsel %vm28, 1, 0
  %v30 = vcvt.s32.f32 %v29
  %vm31 = vcmp.eq.s32.totalorder %v21, 0
  %v32 = vsel %vm31, 1, 0
  %v33 = vcvt.s32.f32 %v32
  %vm34 = vcmp.eq.s32.totalorder %v15, 1
  %v35 = vsel %vm34, 1, 0
  %v36 = vcvt.s32.f32 %v35
  %vm37 = vcmp.eq.s32.totalorder %v17, 1
  %v38 = vsel %vm37, 1, 0
  %v39 = vcvt.s32.f32 %v38
  %vm40 = vcmp.eq.s32.totalorder %v19, 1
  %v41 = vsel %vm40, 1, 0
  %v42 = vcvt.s32.f32 %v41
  %vm43 = vcmp.eq.s32.totalorder %v21, 1
  %v44 = vsel %vm43, 1, 0
  %v45 = vcvt.s32.f32 %v44
  %vm46 = vcmp.eq.s32.totalorder %v15, 2
  %v47 = vsel %vm46, 1, 0
  %v48 = vcvt.s32.f32 %v47
  %vm49 = vcmp.eq.s32.totalorder %v17, 2
  %v50 = vsel %vm49, 1, 0
  %v51 = vcvt.s32.f32 %v50
  %vm52 = vcmp.eq.s32.totalorder %v19, 2
  %v53 = vsel %vm52, 1, 0
  %v54 = vcvt.s32.f32 %v53
  %vm55 = vcmp.eq.s32.totalorder %v21, 2
  %v56 = vsel %vm55, 1, 0
  %v57 = vcvt.s32.f32 %v56
  %vm58 = vcmp.eq.s32.totalorder %v15, 3
  %v59 = vsel %vm58, 1, 0
  %v60 = vcvt.s32.f32 %v59
  %vm61 = vcmp.eq.s32.totalorder %v17, 3
  %v62 = vsel %vm61, 1, 0
  %v63 = vcvt.s32.f32 %v62
  %vm64 = vcmp.eq.s32.totalorder %v19, 3
  %v65 = vsel %vm64, 1, 0
  %v66 = vcvt.s32.f32 %v65
  %vm67 = vcmp.eq.s32.totalorder %v21, 3
  %v68 = vsel %vm67, 1, 0
  %v69 = vcvt.s32.f32 %v68
  %v71 = vrot.slane %v27, 4
  %v74 = vrot.slane %v33, 4
  %v77 = vrot.slane %v39, 4
  %v80 = vrot.slane %v45, 4
  %v83 = vrot.slane %v51, 4
  %v86 = vrot.slane %v57, 4
  %v89 = vrot.slane %v63, 4
  %v92 = vrot.slane %v69, 4
  %vm94 = vcmask 1043456
  %v95 = vsel %vm94, %v24, %v71
  %v96 = vsel %vm94, %v30, %v74
  %v97 = vsel %vm94, %v36, %v77
  %v98 = vsel %vm94, %v42, %v80
  %v99 = vsel %vm94, %v48, %v83
  %v100 = vsel %vm94, %v54, %v86
  %v101 = vsel %vm94, %v60, %v89
  %v102 = vsel %vm94, %v66, %v92
  %v103 = vld [vmem:[%s1] sm:$0xff]
  %v104 = vld [vmem:[%s1 + $0x8] sm:$0xff]
  %v105 = vld [vmem:[%s1 + $0x10] sm:$0xff]
  %v106 = vld [vmem:[%s1 + $0x18] sm:$0xff]
  %v107 = vld [vmem:[%s1 + $0x20] sm:$0x1]
  %vm108 = vcmask 523264
  %v110 = vsel %vm108, %v103, 0
  %v113 = vsel %vm108, %v104, 0
  %v116 = vsel %vm108, %v105, 0
  %v119 = vsel %vm108, %v106, 0
  %v122 = vsel %vm108, %v107, 0
  %124 = vmatprep.subr.mxu0 0.0
  %125 = vmatpush1.msra.mxu0 %v95
  %126 = vmatprep.subr.mxu0 0.0
  %127 = vmatpush1.msra.mxu0 %v96
  %128 = vmatprep.subr.mxu0 0.0
  %129 = vmatpush1.msra.mxu0 %v97
  %130 = vmatprep.subr.mxu0 0.0
  %131 = vmatpush1.msra.mxu0 %v98
  %132 = vmatprep.subr.mxu0 0.0
  %133 = vmatpush1.msra.mxu0 %v99
  %134 = vmatprep.subr.mxu0 0.0
  %135 = vmatpush1.msra.mxu0 %v100
  %136 = vmatprep.subr.mxu0 0.0
  %137 = vmatpush1.msra.mxu0 %v101
  %138 = vmatprep.subr.mxu0 0.0
  %139 = vmatpush1.msra.mxu0 %v102
  %140 = vmatprep.subr.mxu0 0.0
  %141 = vmatpush1.msra.mxu0 0.0
  %142 = vmatprep.subr.mxu0 0.0
  %143 = vmatpush1.msra.mxu0 0.0
  %144 = vmatprep.subr.mxu0 0.0
  %145 = vmatpush1.msra.mxu0 0.0
  %146 = vmatprep.subr.mxu0 0.0
  %147 = vmatpush1.msra.mxu0 0.0
  %148 = vmatprep.subr.mxu0 0.0
  %149 = vmatpush1.msra.mxu0 0.0
  %150 = vmatprep.subr.mxu0 0.0
  %151 = vmatpush1.msra.mxu0 0.0
  %152 = vmatprep.subr.mxu0 0.0
  %153 = vmatpush1.msra.mxu0 0.0
  %154 = vmatprep.subr.mxu0 0.0
  %155 = vmatpush1.msra.mxu0 0.0
  %156 = vmatprep.subr.mxu0 0.0
  %157 = vmatpush1.msra.mxu0 0.0
  %158 = vmatprep.subr.mxu0 0.0
  %159 = vmatpush1.msra.mxu0 0.0
  %160 = vmatprep.subr.mxu0 0.0
  %161 = vmatpush1.msra.mxu0 0.0
  %162 = vmatprep.subr.mxu0 0.0
  %163 = vmatpush1.msra.mxu0 0.0
  %164 = vmatprep.subr.mxu0 0.0
  %165 = vmatpush1.msra.mxu0 0.0
  %166 = vmatprep.subr.mxu0 0.0
  %167 = vmatpush1.msra.mxu0 0.0
  %168 = vmatprep.subr.mxu0 0.0
  %169 = vmatpush1.msra.mxu0 0.0
  %170 = vmatprep.subr.mxu0 0.0
  %171 = vmatpush1.msra.mxu0 0.0
  %172 = vmatprep.subr.mxu0 0.0
  %173 = vmatpush1.msra.mxu0 0.0
  %174 = vmatprep.subr.mxu0 0.0
  %175 = vmatpush1.msra.mxu0 0.0
  %176 = vmatprep.subr.mxu0 0.0
  %177 = vmatpush1.msra.mxu0 0.0
  %178 = vmatprep.subr.mxu0 0.0
  %179 = vmatpush1.msra.mxu0 0.0
  %180 = vmatprep.subr.mxu0 0.0
  %181 = vmatpush1.msra.mxu0 0.0
  %182 = vmatprep.subr.mxu0 0.0
  %183 = vmatpush1.msra.mxu0 0.0
  %184 = vmatprep.subr.mxu0 0.0
  %185 = vmatpush1.msra.mxu0 0.0
  %186 = vmatprep.subr.mxu0 0.0
  %187 = vmatpush1.msra.mxu0 0.0
  %188 = vmatprep.mubr.f32.mxu0 0.0
  %189 = vmatmul.mubr.f32.gmra.mrb[0].mxu0 %v110
  %v190 = vpop.f32.mrb[0].mxu0
  %v191 = vadd.f32 0.0, %v190
  %v192 = vpop.f32.mrb[0].mxu0
  %193 = vmatprep.mubr.f32.mxu0 0.0
  %194 = vmatmul.mubr.f32.gmra.mrb[0].mxu0 %v113
  %v195 = vpop.f32.mrb[0].mxu0
  %v196 = vadd.f32 0.0, %v195
  %v197 = vpop.f32.mrb[0].mxu0
  %198 = vmatprep.mubr.f32.mxu0 0.0
  %199 = vmatmul.mubr.f32.gmra.mrb[0].mxu0 %v116
  %v200 = vpop.f32.mrb[0].mxu0
  %v201 = vadd.f32 0.0, %v200
  %v202 = vpop.f32.mrb[0].mxu0
  %203 = vmatprep.mubr.f32.mxu0 0.0
  %204 = vmatmul.mubr.f32.gmra.mrb[0].mxu0 %v119
  %v205 = vpop.f32.mrb[0].mxu0
  %v206 = vadd.f32 0.0, %v205
  %v207 = vpop.f32.mrb[0].mxu0
  %208 = vmatprep.mubr.f32.mxu0 0.0
  %209 = vmatmul.mubr.f32.gmra.mrb[0].mxu0 %v122
  %v210 = vpop.f32.mrb[0].mxu0
  %v211 = vadd.f32 0.0, %v210
  %v212 = vpop.f32.mrb[0].mxu0
  %213 = vdwg.mxu0
  %v214 = vmul.f32 %v191, %v191
  %v215 = vmul.f32 %v196, %v196
  %v216 = vmul.f32 %v201, %v201
  %v217 = vmul.f32 %v206, %v206
  %v218 = vadd.f32 %v214, %v215
  %v219 = vadd.f32 %v218, %v216
  %v220 = vadd.f32 %v219, %v217
  %v221 = vrot.slane %v220, 4
  %v222 = vadd.f32 %v220, %v221
  %v223 = vrot.slane %v222, 2
  %v224 = vadd.f32 %v222, %v223
  %v225 = vrot.slane %v224, 1
  %v226 = vadd.f32 %v224, %v225
  %v227 = vsub.f32 %v226, %v211
  %v228 = vmul.f32 %v227, 0.5
  %v229 = vld [vmem:[%s2] sm:$0x1]
  %v230 = vadd.f32 %v229, %v228
  %231 = vst [vmem:[%s3] sm:$0x1] %v230
  // Predicated region
  $region14: #{qfm_forward.1} parent=0 // pred_check
    _
  $region15: #{qfm_forward.1} parent=0 // pred_check_branch
    %233 = sbr.rel (0) target = $region17
  $region16: #{qfm_forward.1} parent=0 // pred_region
    _
  $region17: #{qfm_forward.1} parent=0 // pred_fallthru
    _
  // Predicated region
  $region18: #{qfm_forward.1} parent=0 // pred_check
    _
  $region19: #{qfm_forward.1} parent=0 // pred_check_branch
    %235 = sbr.rel (0) target = $region21
  $region20: #{qfm_forward.1} parent=0 // pred_region
    _
  $region21: #{qfm_forward.1} parent=0 // pred_fallthru
    _

</llo_original>
